<compile_context>
chip_gen: v7x
topology: tpu7x:2x2x1
jax: 0.10.0
libtpu: 0.0.40
codegen_flags: <defaults>
</compile_context>

<pallas_src>
import jax
import jax.numpy as jnp
from jax.experimental import pallas as pl
from jax.experimental.pallas import tpu as pltpu

# --- model hyper-parameters (small, consistent with the module's forward) ---------
BATCH = 2
IN_CH = 3                      # imagenet-style RGB input
SPATIAL = 16                   # H = W = 16
HW = SPATIAL * SPATIAL         # 256 spatial positions per image
NUM_FTRS = 32                  # backbone feature width (the "in_features" of the new fc)
NUM_CLASSES = 2                # num_out_classes
KSIZE = 3                      # 3x3 conv in the stub backbone
K_IM2COL = KSIZE * KSIZE * IN_CH   # 27 = contraction dim of the im2col matmul
LANE = 128                     # lane-dense padded width for the classifier output


def transfer_model_kernel(patch_ref, wcol_ref, bc_ref, pool_ref, wf_ref, bf_ref,
                          out_ref):
    """Fused backbone-features + classifier-head kernel; one invocation = whole batch.

    patch_ref: [B*HW, 27]        bf16 im2col patches                     (VMEM)
    wcol_ref : [27, NUM_FTRS]    bf16 flattened 3x3 conv weights         (VMEM)
    bc_ref   : [1, NUM_FTRS]     f32 conv bias                           (VMEM)
    pool_ref : [B, B*HW]         f32 block-diagonal GAP matrix (1/HW)    (VMEM)
    wf_ref   : [NUM_FTRS, 128]   f32 fc weight, lane-padded              (VMEM)
    bf_ref   : [1, 128]          f32 fc bias, lane-padded                (VMEM)
    out_ref  : [B, 128]          f32 lane-padded logits                  (VMEM)
    """
    # 3x3 "same" conv as a single batched im2col matmul, f32 accumulation on MXU.
    feat = jnp.dot(patch_ref[...], wcol_ref[...],
                   preferred_element_type=jnp.float32)          # [B*HW, NUM_FTRS]

    # conv bias + ReLU (f32 epilogue; v5e has no bf16 VPU, footprint is tiny anyway)
    feat = jnp.maximum(feat + bc_ref[...], 0.0)

    # global average pool over each image's HW rows as a matmul with the
    # precomputed block-diagonal pooling matrix (MXU instead of XLU reduction).
    pooled = jnp.dot(pool_ref[...], feat,
                     preferred_element_type=jnp.float32)        # [B, NUM_FTRS]

    # TransferModel head: Dropout(p) in eval mode is identity, then Linear.
    # Batched over the whole block: one [B,32]x[32,128] matmul (f32 LHS, no bf16 cast).
    logits = jnp.dot(pooled, wf_ref[...],
                     preferred_element_type=jnp.float32) + bf_ref[...]
    out_ref[...] = logits.astype(out_ref.dtype)                 # [B, 128]


def init_params(key):
    """Deterministic parameter init (shapes implied by the module's __init__)."""
    k1, k2, k3, k4 = jax.random.split(key, 4)
    wc = jax.random.normal(k1, (KSIZE, KSIZE, IN_CH, NUM_FTRS), jnp.float32)
    wc = wc * (2.0 / (KSIZE * KSIZE * IN_CH)) ** 0.5            # kaiming-ish
    bc = jax.random.normal(k2, (1, NUM_FTRS), jnp.float32) * 0.01
    wf = jax.random.normal(k3, (NUM_FTRS, NUM_CLASSES), jnp.float32)
    wf = wf * (1.0 / NUM_FTRS) ** 0.5
    bf = jax.random.normal(k4, (1, NUM_CLASSES), jnp.float32) * 0.01
    return wc, bc, wf, bf


def prepare_params(wc, bc, wf, bf, batch):
    """Static weight plumbing, done ONCE (not inside the jitted forward)."""
    # flattened conv weights, bf16 MXU operand; tap order (dy, dx, cin) matches the
    # im2col tap order built in the wrapper.
    wcol = wc.reshape(K_IM2COL, NUM_FTRS).astype(jnp.bfloat16)
    # lane-dense classifier head: pad the 2-class output dim to 128 lanes (f32).
    wf_pad = jnp.zeros((NUM_FTRS, LANE), jnp.float32).at[:, :NUM_CLASSES].set(wf)
    bf_pad = jnp.zeros((1, LANE), jnp.float32).at[:, :NUM_CLASSES].set(bf)
    # block-diagonal global-average-pool matrix: pool[b, b*HW:(b+1)*HW] = 1/HW.
    pool = jnp.kron(jnp.eye(batch, dtype=jnp.float32),
                    jnp.full((1, HW), 1.0 / HW, jnp.float32))   # [B, B*HW]
    return wcol, bc.astype(jnp.float32), pool, wf_pad, bf_pad


@jax.jit
def transfer_model_forward(x_nchw, wcol, bc, pool, wf_pad, bf_pad):
    # ---- layout plumbing in the wrapper (no hot-path compute) ---------------------
    B, _, H, W = x_nchw.shape
    x = jnp.transpose(x_nchw, (0, 2, 3, 1)).astype(jnp.bfloat16)     # NCHW -> NHWC bf16
    xp = jnp.pad(x, ((0, 0), (1, 1), (1, 1), (0, 0)))                # "same" 3x3 pad

    # im2col: [B*HW, 9*Cin]; tap order (dy, dx, cin) matches wcol's reshape order.
    taps = [xp[:, dy:dy + H, dx:dx + W, :]
            for dy in range(KSIZE) for dx in range(KSIZE)]
    patches = jnp.concatenate(taps, axis=-1).reshape(B * H * W, K_IM2COL)

    out = pl.pallas_call(
        transfer_model_kernel,
        out_shape=jax.ShapeDtypeStruct((B, LANE), jnp.float32),
        grid=(1,),                                                    # single step: whole batch
        in_specs=[
            pl.BlockSpec((B * H * W, K_IM2COL), lambda i: (0, 0)),    # batched patches
            pl.BlockSpec((K_IM2COL, NUM_FTRS), lambda i: (0, 0)),     # shared conv weights
            pl.BlockSpec((1, NUM_FTRS), lambda i: (0, 0)),            # conv bias
            pl.BlockSpec((B, B * H * W), lambda i: (0, 0)),           # GAP matrix
            pl.BlockSpec((NUM_FTRS, LANE), lambda i: (0, 0)),         # fc weight (lane-padded)
            pl.BlockSpec((1, LANE), lambda i: (0, 0)),                # fc bias (lane-padded)
        ],
        out_specs=pl.BlockSpec((B, LANE), lambda i: (0, 0)),
        compiler_params=pltpu.CompilerParams(
            dimension_semantics=("arbitrary",),
            # let XLA fuse the im2col producer ops into the pallas_call input
            allow_input_fusion=[True, False, False, False, False, False]),
    )(patches, wcol, bc, pool, wf_pad, bf_pad)

    # slice the real logits out of the lane-padded output
    return out[:, :NUM_CLASSES]


if __name__ == "__main__":
    key = jax.random.PRNGKey(0)
    k_x, k_p = jax.random.split(key)

    # example input: batch=2, 3 channels, 16x16 spatial, NCHW like PyTorch
    x = jax.random.normal(k_x, (BATCH, IN_CH, SPATIAL, SPATIAL), jnp.float32)
    wc, bc, wf, bf = init_params(k_p)

    # static plumbing hoisted out of the forward (done once, reused every call)
    wcol, bc_f, pool, wf_pad, bf_pad = prepare_params(wc, bc, wf, bf, BATCH)

    logits = transfer_model_forward(x, wcol, bc_f, pool, wf_pad, bf_pad)
    jax.block_until_ready(logits)

    assert logits.shape == (BATCH, NUM_CLASSES), logits.shape
    assert logits.dtype == jnp.float32
    print("KERNEL_OK")
</pallas_src>

<mosaic_0001>
module attributes {stable_mosaic.version = 11 : i64} {
  func.func @transfer_model_kernel(%arg0: i32, %arg1: memref<512x27xbf16, #tpu.memory_space<vmem>>, %arg2: memref<27x32xbf16, #tpu.memory_space<vmem>>, %arg3: memref<1x32xf32, #tpu.memory_space<vmem>>, %arg4: memref<2x512xf32, #tpu.memory_space<vmem>>, %arg5: memref<32x128xf32, #tpu.memory_space<vmem>>, %arg6: memref<1x128xf32, #tpu.memory_space<vmem>>, %arg7: memref<2x128xf32, #tpu.memory_space<vmem>>) attributes {dimension_semantics = [#tpu.dimension_semantics<arbitrary>], iteration_bounds = array<i64: 1>, scalar_prefetch = 0 : i64, scratch_operands = 0 : i64, tpu.core_type = #tpu.core_type<tc>, window_params = [{pipeline_mode = #tpu.pipeline_mode<synchronous>, transform_indices = @transform_0, window_bounds = array<i64: 512, 27>}, {pipeline_mode = #tpu.pipeline_mode<synchronous>, transform_indices = @transform_1, window_bounds = array<i64: 27, 32>}, {pipeline_mode = #tpu.pipeline_mode<synchronous>, transform_indices = @transform_2, window_bounds = array<i64: 1, 32>}, {pipeline_mode = #tpu.pipeline_mode<synchronous>, transform_indices = @transform_3, window_bounds = array<i64: 2, 512>}, {pipeline_mode = #tpu.pipeline_mode<synchronous>, transform_indices = @transform_4, window_bounds = array<i64: 32, 128>}, {pipeline_mode = #tpu.pipeline_mode<synchronous>, transform_indices = @transform_5, window_bounds = array<i64: 1, 128>}, {pipeline_mode = #tpu.pipeline_mode<synchronous>, transform_indices = @transform_6, window_bounds = array<i64: 2, 128>}]} {
    %c0 = arith.constant 0 : index
    %c0_0 = arith.constant 0 : index
    %0 = vector.load %arg1[%c0, %c0_0] : memref<512x27xbf16, #tpu.memory_space<vmem>>, vector<512x27xbf16>
    %c0_1 = arith.constant 0 : index
    %c0_2 = arith.constant 0 : index
    %1 = vector.load %arg2[%c0_1, %c0_2] : memref<27x32xbf16, #tpu.memory_space<vmem>>, vector<27x32xbf16>
    %cst = arith.constant dense<0.000000e+00> : vector<512x32xf32>
    %2 = tpu.matmul %0, %1, %cst {dimension_numbers = #tpu.dot_dimension_numbers<[1], [0], [0], [1], [0, 0, 1, 1], [], []>} : vector<512x27xbf16>, vector<27x32xbf16>, vector<512x32xf32> -> vector<512x32xf32>
    %c0_3 = arith.constant 0 : index
    %c0_4 = arith.constant 0 : index
    %3 = vector.load %arg3[%c0_3, %c0_4] : memref<1x32xf32, #tpu.memory_space<vmem>>, vector<1x32xf32>
    %4 = vector.broadcast %3 : vector<1x32xf32> to vector<512x32xf32>
    %5 = arith.addf %2, %4 : vector<512x32xf32>
    %cst_5 = arith.constant 0.000000e+00 : f32
    %6 = vector.broadcast %cst_5 : f32 to vector<512x32xf32>
    %7 = arith.maximumf %5, %6 : vector<512x32xf32>
    %c0_6 = arith.constant 0 : index
    %c0_7 = arith.constant 0 : index
    %8 = vector.load %arg4[%c0_6, %c0_7] : memref<2x512xf32, #tpu.memory_space<vmem>>, vector<2x512xf32>
    %cst_8 = arith.constant dense<0.000000e+00> : vector<2x32xf32>
    %9 = tpu.matmul %8, %7, %cst_8 {dimension_numbers = #tpu.dot_dimension_numbers<[1], [0], [0], [1], [0, 0, 1, 1], [], []>} : vector<2x512xf32>, vector<512x32xf32>, vector<2x32xf32> -> vector<2x32xf32>
    %c0_9 = arith.constant 0 : index
    %c0_10 = arith.constant 0 : index
    %10 = vector.load %arg5[%c0_9, %c0_10] : memref<32x128xf32, #tpu.memory_space<vmem>>, vector<32x128xf32>
    %cst_11 = arith.constant dense<0.000000e+00> : vector<2x128xf32>
    %11 = tpu.matmul %9, %10, %cst_11 {dimension_numbers = #tpu.dot_dimension_numbers<[1], [0], [0], [1], [0, 0, 1, 1], [], []>} : vector<2x32xf32>, vector<32x128xf32>, vector<2x128xf32> -> vector<2x128xf32>
    %c0_12 = arith.constant 0 : index
    %c0_13 = arith.constant 0 : index
    %12 = vector.load %arg6[%c0_12, %c0_13] : memref<1x128xf32, #tpu.memory_space<vmem>>, vector<1x128xf32>
    %13 = vector.broadcast %12 : vector<1x128xf32> to vector<2x128xf32>
    %14 = arith.addf %11, %13 : vector<2x128xf32>
    %c0_14 = arith.constant 0 : index
    %c0_15 = arith.constant 0 : index
    %15 = vector.load %arg7[%c0_14, %c0_15] : memref<2x128xf32, #tpu.memory_space<vmem>>, vector<2x128xf32>
    tpu.vector_store %arg7[%c0_14, %c0_15], %14 {strides = array<i32>} : memref<2x128xf32, #tpu.memory_space<vmem>>, vector<2x128xf32>,
    return
  }
  func.func @transform_0(%arg0: i32) -> (i32, i32) {
    %c0_i32 = arith.constant 0 : i32
    %c0_i32_0 = arith.constant 0 : i32
    %c0_i32_1 = arith.constant 0 : i32
    return %c0_i32, %c0_i32_0 : i32, i32
  }
  func.func @transform_1(%arg0: i32) -> (i32, i32) {
    %c0_i32 = arith.constant 0 : i32
    %c0_i32_0 = arith.constant 0 : i32
    %c0_i32_1 = arith.constant 0 : i32
    return %c0_i32, %c0_i32_0 : i32, i32
  }
  func.func @transform_2(%arg0: i32) -> (i32, i32) {
    %c0_i32 = arith.constant 0 : i32
    %c0_i32_0 = arith.constant 0 : i32
    %c0_i32_1 = arith.constant 0 : i32
    return %c0_i32, %c0_i32_0 : i32, i32
  }
  func.func @transform_3(%arg0: i32) -> (i32, i32) {
    %c0_i32 = arith.constant 0 : i32
    %c0_i32_0 = arith.constant 0 : i32
    %c0_i32_1 = arith.constant 0 : i32
    return %c0_i32, %c0_i32_0 : i32, i32
  }
  func.func @transform_4(%arg0: i32) -> (i32, i32) {
    %c0_i32 = arith.constant 0 : i32
    %c0_i32_0 = arith.constant 0 : i32
    %c0_i32_1 = arith.constant 0 : i32
    return %c0_i32, %c0_i32_0 : i32, i32
  }
  func.func @transform_5(%arg0: i32) -> (i32, i32) {
    %c0_i32 = arith.constant 0 : i32
    %c0_i32_0 = arith.constant 0 : i32
    %c0_i32_1 = arith.constant 0 : i32
    return %c0_i32, %c0_i32_0 : i32, i32
  }
  func.func @transform_6(%arg0: i32) -> (i32, i32) {
    %c0_i32 = arith.constant 0 : i32
    %c0_i32_0 = arith.constant 0 : i32
    %c0_i32_1 = arith.constant 0 : i32
    return %c0_i32, %c0_i32_0 : i32, i32
  }
}

</mosaic_0001>

<llo_original>
// kernel: transfer_model_forward.1
$region0: #{transfer_model_forward.1}
  #allocation0 [shape = 'u32[]', space=smem, size = 0x4, offset = 0x4, fixed_abs, tag = 'smem constant byte address 0x4 - core index']
  #allocation1 [shape = 'u32[144,128]{1,0:T(1,128)}', space=vmem, size = 0x12000, scoped, tag = 'internal scratch']
  %s0 = inlined_call_operand.vmem [shape: bf16[512,27], index: 0, kind: input, shape index: {}]
  %s1 = inlined_call_operand.vmem [shape: bf16[27,32], index: 1, kind: input, shape index: {}]
  %s2 = inlined_call_operand.vmem [shape: f32[1,32], index: 2, kind: input, shape index: {}]
  %s3 = inlined_call_operand.vmem [shape: f32[2,512], index: 3, kind: input, shape index: {}]
  %s4 = inlined_call_operand.vmem [shape: f32[32,128], index: 4, kind: input, shape index: {}]
  %s5 = inlined_call_operand.vmem [shape: f32[1,128], index: 5, kind: input, shape index: {}]
  %s6 = inlined_call_operand.hbm [shape: f32[2,128], index: 6, kind: output, shape index: {}]
  %s7 = sld [smem:[#allocation0]]
  $region34: #{transfer_model_forward.1} parent=0
    _
  %s9 = ssub.s32 1, %s7
  %s10 = scalar_select 0, %s9, %s7
  $region1: #{transfer_model_forward.1} parent=0
    #allocation2 [shape = 'u8[1024]{0}', space=vmem, size = 0x400, scoped, tag = 'output window, operand 0, single buffered']
    #allocation3 [shape = 's32[1]{0}', space=sflag, size = 0x4, scoped, tag = 'scoped memory for transfer_model_forward.1']
    %11 = vsyncpa [#allocation3], 0
    // Predicated region
    $region2: #{transfer_model_forward.1} parent=1 // pred_check
      _
    $region3: #{transfer_model_forward.1} parent=1 // pred_check_branch
      %13 = sbr.rel (0) target = $region5
    $region4: #{transfer_model_forward.1} parent=1 // pred_region
      _
    $region5: #{transfer_model_forward.1} parent=1 // pred_fallthru
      _
    // Predicated region
    $region6: #{transfer_model_forward.1} parent=1 // pred_check
      _
    $region7: #{transfer_model_forward.1} parent=1 // pred_check_branch
      %15 = sbr.rel (0) target = $region9
    $region8: #{transfer_model_forward.1} parent=1 // pred_region
      _
    $region9: #{transfer_model_forward.1} parent=1 // pred_fallthru
      _
    // Predicated region
    $region10: #{transfer_model_forward.1} parent=1 // pred_check
      _
    $region11: #{transfer_model_forward.1} parent=1 // pred_check_branch
      %17 = sbr.rel (0) target = $region13
    $region12: #{transfer_model_forward.1} parent=1 // pred_region
      _
    $region13: #{transfer_model_forward.1} parent=1 // pred_fallthru
      _
    // Predicated region
    $region14: #{transfer_model_forward.1} parent=1 // pred_check
      _
    $region15: #{transfer_model_forward.1} parent=1 // pred_check_branch
      %19 = sbr.rel (0) target = $region17
    $region16: #{transfer_model_forward.1} parent=1 // pred_region
      _
    $region17: #{transfer_model_forward.1} parent=1 // pred_fallthru
      _
    // Predicated region
    $region18: #{transfer_model_forward.1} parent=1 // pred_check
      _
    $region19: #{transfer_model_forward.1} parent=1 // pred_check_branch
      %21 = sbr.rel (0) target = $region21
    $region20: #{transfer_model_forward.1} parent=1 // pred_region
      _
    $region21: #{transfer_model_forward.1} parent=1 // pred_fallthru
      _
    // Predicated region
    $region22: #{transfer_model_forward.1} parent=1 // pred_check
      _
    $region23: #{transfer_model_forward.1} parent=1 // pred_check_branch
      %23 = sbr.rel (0) target = $region25
    $region24: #{transfer_model_forward.1} parent=1 // pred_region
      _
    $region25: #{transfer_model_forward.1} parent=1 // pred_fallthru
      _
    %v25 = vld [vmem:[%s0] sm:$0xf]
    %v26 = vld [vmem:[%s0 + $0x4] sm:$0xf]
    %v27 = vld [vmem:[%s0 + $0x8] sm:$0xf]
    %v28 = vld [vmem:[%s0 + $0xc] sm:$0xf]
    %v29 = vld [vmem:[%s0 + $0x10] sm:$0xf]
    %v30 = vld [vmem:[%s0 + $0x14] sm:$0xf]
    %v31 = vld [vmem:[%s0 + $0x18] sm:$0xf]
    %v32 = vld [vmem:[%s0 + $0x1c] sm:$0xf]
    %v33 = vld [vmem:[%s0 + $0x20] sm:$0xf]
    %v34 = vld [vmem:[%s0 + $0x24] sm:$0xf]
    %v35 = vld [vmem:[%s0 + $0x28] sm:$0xf]
    %v36 = vld [vmem:[%s0 + $0x2c] sm:$0xf]
    %v37 = vld [vmem:[%s0 + $0x30] sm:$0xf]
    %v38 = vld [vmem:[%s0 + $0x34] sm:$0xf]
    %v39 = vld [vmem:[%s0 + $0x38] sm:$0xf]
    %v40 = vld [vmem:[%s0 + $0x3c] sm:$0xf]
    %v41 = vld [vmem:[%s0 + $0x40] sm:$0xf]
    %v42 = vld [vmem:[%s0 + $0x44] sm:$0xf]
    %v43 = vld [vmem:[%s0 + $0x48] sm:$0xf]
    %v44 = vld [vmem:[%s0 + $0x4c] sm:$0xf]
    %v45 = vld [vmem:[%s0 + $0x50] sm:$0xf]
    %v46 = vld [vmem:[%s0 + $0x54] sm:$0xf]
    %v47 = vld [vmem:[%s0 + $0x58] sm:$0xf]
    %v48 = vld [vmem:[%s0 + $0x5c] sm:$0xf]
    %v49 = vld [vmem:[%s0 + $0x60] sm:$0xf]
    %v50 = vld [vmem:[%s0 + $0x64] sm:$0xf]
    %v51 = vld [vmem:[%s0 + $0x68] sm:$0xf]
    %v52 = vld [vmem:[%s0 + $0x6c] sm:$0xf]
    %v53 = vld [vmem:[%s0 + $0x70] sm:$0xf]
    %v54 = vld [vmem:[%s0 + $0x74] sm:$0xf]
    %v55 = vld [vmem:[%s0 + $0x78] sm:$0xf]
    %v56 = vld [vmem:[%s0 + $0x7c] sm:$0xf]
    %v57 = vld [vmem:[%s0 + $0x80] sm:$0xf]
    %v58 = vld [vmem:[%s0 + $0x84] sm:$0xf]
    %v59 = vld [vmem:[%s0 + $0x88] sm:$0xf]
    %v60 = vld [vmem:[%s0 + $0x8c] sm:$0xf]
    %v61 = vld [vmem:[%s0 + $0x90] sm:$0xf]
    %v62 = vld [vmem:[%s0 + $0x94] sm:$0xf]
    %v63 = vld [vmem:[%s0 + $0x98] sm:$0xf]
    %v64 = vld [vmem:[%s0 + $0x9c] sm:$0xf]
    %v65 = vld [vmem:[%s0 + $0xa0] sm:$0xf]
    %v66 = vld [vmem:[%s0 + $0xa4] sm:$0xf]
    %v67 = vld [vmem:[%s0 + $0xa8] sm:$0xf]
    %v68 = vld [vmem:[%s0 + $0xac] sm:$0xf]
    %v69 = vld [vmem:[%s0 + $0xb0] sm:$0xf]
    %v70 = vld [vmem:[%s0 + $0xb4] sm:$0xf]
    %v71 = vld [vmem:[%s0 + $0xb8] sm:$0xf]
    %v72 = vld [vmem:[%s0 + $0xbc] sm:$0xf]
    %v73 = vld [vmem:[%s0 + $0xc0] sm:$0xf]
    %v74 = vld [vmem:[%s0 + $0xc4] sm:$0xf]
    %v75 = vld [vmem:[%s0 + $0xc8] sm:$0xf]
    %v76 = vld [vmem:[%s0 + $0xcc] sm:$0xf]
    %v77 = vld [vmem:[%s0 + $0xd0] sm:$0xf]
    %v78 = vld [vmem:[%s0 + $0xd4] sm:$0xf]
    %v79 = vld [vmem:[%s0 + $0xd8] sm:$0xf]
    %v80 = vld [vmem:[%s0 + $0xdc] sm:$0xf]
    %v81 = vld [vmem:[%s0 + $0xe0] sm:$0xf]
    %v82 = vld [vmem:[%s0 + $0xe4] sm:$0xf]
    %v83 = vld [vmem:[%s0 + $0xe8] sm:$0xf]
    %v84 = vld [vmem:[%s0 + $0xec] sm:$0xf]
    %v85 = vld [vmem:[%s0 + $0xf0] sm:$0xf]
    %v86 = vld [vmem:[%s0 + $0xf4] sm:$0xf]
    %v87 = vld [vmem:[%s0 + $0xf8] sm:$0xf]
    %v88 = vld [vmem:[%s0 + $0xfc] sm:$0xf]
    %v89 = vld [vmem:[%s1] sm:$0xf]
    %v90 = vld [vmem:[%s1 + $0x4] sm:$0xf]
    %v91 = vld [vmem:[%s1 + $0x8] sm:$0xf]
    %v92 = vld [vmem:[%s1 + $0xc] sm:$0x3]
    %v93 = vld [vmem:[%s2] sm:$0x1]
    %v95 = vlaneseq
    %v96 = vshrl.u32 %v95, 7
    %v97 = vsub.s32 0, %v96
    %v98 = vrot.slane %v93, %v97
    %v164 = vunpack.c.l.b16 %v25
    %v165 = vunpack.c.l.b16 %v26
    %v166 = vunpack.c.l.b16 %v27
    %v167 = vunpack.c.l.b16 %v28
    %v168 = vunpack.c.l.b16 %v29
    %v169 = vunpack.c.l.b16 %v30
    %v170 = vunpack.c.l.b16 %v31
    %v171 = vunpack.c.l.b16 %v32
    %v172 = vunpack.c.l.b16 %v33
    %v173 = vunpack.c.l.b16 %v34
    %v174 = vunpack.c.l.b16 %v35
    %v175 = vunpack.c.l.b16 %v36
    %v176 = vunpack.c.l.b16 %v37
    %v177 = vunpack.c.l.b16 %v38
    %v178 = vunpack.c.l.b16 %v39
    %v179 = vunpack.c.l.b16 %v40
    %v180 = vunpack.c.l.b16 %v41
    %v181 = vunpack.c.l.b16 %v42
    %v182 = vunpack.c.l.b16 %v43
    %v183 = vunpack.c.l.b16 %v44
    %v184 = vunpack.c.l.b16 %v45
    %v185 = vunpack.c.l.b16 %v46
    %v186 = vunpack.c.l.b16 %v47
    %v187 = vunpack.c.l.b16 %v48
    %v188 = vunpack.c.l.b16 %v49
    %v189 = vunpack.c.l.b16 %v50
    %v190 = vunpack.c.l.b16 %v51
    %v191 = vunpack.c.l.b16 %v52
    %v192 = vunpack.c.l.b16 %v53
    %v193 = vunpack.c.l.b16 %v54
    %v194 = vunpack.c.l.b16 %v55
    %v195 = vunpack.c.l.b16 %v56
    %v196 = vunpack.c.l.b16 %v57
    %v197 = vunpack.c.l.b16 %v58
    %v198 = vunpack.c.l.b16 %v59
    %v199 = vunpack.c.l.b16 %v60
    %v200 = vunpack.c.l.b16 %v61
    %v201 = vunpack.c.l.b16 %v62
    %v202 = vunpack.c.l.b16 %v63
    %v203 = vunpack.c.l.b16 %v64
    %v204 = vunpack.c.l.b16 %v65
    %v205 = vunpack.c.l.b16 %v66
    %v206 = vunpack.c.l.b16 %v67
    %v207 = vunpack.c.l.b16 %v68
    %v208 = vunpack.c.l.b16 %v69
    %v209 = vunpack.c.l.b16 %v70
    %v210 = vunpack.c.l.b16 %v71
    %v211 = vunpack.c.l.b16 %v72
    %v212 = vunpack.c.l.b16 %v73
    %v213 = vunpack.c.l.b16 %v74
    %v214 = vunpack.c.l.b16 %v75
    %v215 = vunpack.c.l.b16 %v76
    %v216 = vunpack.c.l.b16 %v77
    %v217 = vunpack.c.l.b16 %v78
    %v218 = vunpack.c.l.b16 %v79
    %v219 = vunpack.c.l.b16 %v80
    %v220 = vunpack.c.l.b16 %v81
    %v221 = vunpack.c.l.b16 %v82
    %v222 = vunpack.c.l.b16 %v83
    %v223 = vunpack.c.l.b16 %v84
    %v224 = vunpack.c.l.b16 %v85
    %v225 = vunpack.c.l.b16 %v86
    %v226 = vunpack.c.l.b16 %v87
    %v227 = vunpack.c.l.b16 %v88
    %v228 = vpack.c.b16 %v165, %v164
    %v229 = vpack.c.b16 %v167, %v166
    %v230 = vpack.c.b16 %v169, %v168
    %v231 = vpack.c.b16 %v171, %v170
    %v232 = vpack.c.b16 %v173, %v172
    %v233 = vpack.c.b16 %v175, %v174
    %v234 = vpack.c.b16 %v177, %v176
    %v235 = vpack.c.b16 %v179, %v178
    %v236 = vpack.c.b16 %v181, %v180
    %v237 = vpack.c.b16 %v183, %v182
    %v238 = vpack.c.b16 %v185, %v184
    %v239 = vpack.c.b16 %v187, %v186
    %v240 = vpack.c.b16 %v189, %v188
    %v241 = vpack.c.b16 %v191, %v190
    %v242 = vpack.c.b16 %v193, %v192
    %v243 = vpack.c.b16 %v195, %v194
    %v244 = vpack.c.b16 %v197, %v196
    %v245 = vpack.c.b16 %v199, %v198
    %v246 = vpack.c.b16 %v201, %v200
    %v247 = vpack.c.b16 %v203, %v202
    %v248 = vpack.c.b16 %v205, %v204
    %v249 = vpack.c.b16 %v207, %v206
    %v250 = vpack.c.b16 %v209, %v208
    %v251 = vpack.c.b16 %v211, %v210
    %v252 = vpack.c.b16 %v213, %v212
    %v253 = vpack.c.b16 %v215, %v214
    %v254 = vpack.c.b16 %v217, %v216
    %v255 = vpack.c.b16 %v219, %v218
    %v256 = vpack.c.b16 %v221, %v220
    %v257 = vpack.c.b16 %v223, %v222
    %v258 = vpack.c.b16 %v225, %v224
    %v259 = vpack.c.b16 %v227, %v226
    %v264 = vunpack.c.l.b16 %v89
    %v265 = vunpack.c.l.b16 %v90
    %v266 = vunpack.c.l.b16 %v91
    %v267 = vunpack.c.l.b16 %v92
    %v268 = vpack.c.b16 %v265, %v264
    %v269 = vpack.c.b16 %v267, %v266
    %vm271 = vcmask 220160
    %v273 = vsel %vm271, %v228, 0
    %v276 = vsel %vm271, %v229, 0
    %v279 = vsel %vm271, %v230, 0
    %v282 = vsel %vm271, %v231, 0
    %v285 = vsel %vm271, %v232, 0
    %v288 = vsel %vm271, %v233, 0
    %v291 = vsel %vm271, %v234, 0
    %v294 = vsel %vm271, %v235, 0
    %v297 = vsel %vm271, %v236, 0
    %v300 = vsel %vm271, %v237, 0
    %v303 = vsel %vm271, %v238, 0
    %v306 = vsel %vm271, %v239, 0
    %v309 = vsel %vm271, %v240, 0
    %v312 = vsel %vm271, %v241, 0
    %v315 = vsel %vm271, %v242, 0
    %v318 = vsel %vm271, %v243, 0
    %v321 = vsel %vm271, %v244, 0
    %v324 = vsel %vm271, %v245, 0
    %v327 = vsel %vm271, %v246, 0
    %v330 = vsel %vm271, %v247, 0
    %v333 = vsel %vm271, %v248, 0
    %v336 = vsel %vm271, %v249, 0
    %v339 = vsel %vm271, %v250, 0
    %v342 = vsel %vm271, %v251, 0
    %v345 = vsel %vm271, %v252, 0
    %v348 = vsel %vm271, %v253, 0
    %v351 = vsel %vm271, %v254, 0
    %v354 = vsel %vm271, %v255, 0
    %v357 = vsel %vm271, %v256, 0
    %v360 = vsel %vm271, %v257, 0
    %v363 = vsel %vm271, %v258, 0
    %v366 = vsel %vm271, %v259, 0
    %vm368 = vcmask 1044480
    %vm369 = vcmask 1045504
    %v370 = vsel %vm368, 4294967295, 65535
    %v371 = vsel %vm369, %v370, 0
    %v373 = vand.u32 %v269, %v371
    %375 = vmatprep.subr.bf16.mxu0 0
    %376 = vmatpush1.bf16.msra.mxu0 %v268
    %377 = vmatprep.subr.bf16.mxu0 0
    %378 = vmatpush1.bf16.msra.mxu0 %v373
    %379 = vmatprep.subr.bf16.mxu0 0
    %380 = vmatpush1.bf16.msra.mxu0 0
    %381 = vmatprep.subr.bf16.mxu0 0
    %382 = vmatpush1.bf16.msra.mxu0 0
    %383 = vmatprep.subr.bf16.mxu0 0
    %384 = vmatpush1.bf16.msra.mxu0 0
    %385 = vmatprep.subr.bf16.mxu0 0
    %386 = vmatpush1.bf16.msra.mxu0 0
    %387 = vmatprep.subr.bf16.mxu0 0
    %388 = vmatpush1.bf16.msra.mxu0 0
    %389 = vmatprep.subr.bf16.mxu0 0
    %390 = vmatpush1.bf16.msra.mxu0 0
    %391 = vmatprep.subr.bf16.mxu0 0
    %392 = vmatpush1.bf16.msra.mxu0 0
    %393 = vmatprep.subr.bf16.mxu0 0
    %394 = vmatpush1.bf16.msra.mxu0 0
    %395 = vmatprep.subr.bf16.mxu0 0
    %396 = vmatpush1.bf16.msra.mxu0 0
    %397 = vmatprep.subr.bf16.mxu0 0
    %398 = vmatpush1.bf16.msra.mxu0 0
    %399 = vmatprep.subr.bf16.mxu0 0
    %400 = vmatpush1.bf16.msra.mxu0 0
    %401 = vmatprep.subr.bf16.mxu0 0
    %402 = vmatpush1.bf16.msra.mxu0 0
    %403 = vmatprep.subr.bf16.mxu0 0
    %404 = vmatpush1.bf16.msra.mxu0 0
    %405 = vmatprep.subr.bf16.mxu0 0
    %406 = vmatpush1.bf16.msra.mxu0 0
    %407 = vmatprep.mubr.bf16.mxu0 0
    %408 = vmatmul.mubr.bf16.gmra.mrb[0].mxu0 %v273
    %v409 = vpop.f32.mrb[0].mxu0
    %v410 = vadd.f32 %v98, %v409
    %v411 = vpop.f32.mrb[0].mxu0
    %v412 = vpop.f32.mrb[0].mxu0
    %v413 = vadd.f32 %v98, %v412
    %v414 = vpop.f32.mrb[0].mxu0
    %415 = vmatprep.mubr.bf16.mxu0 0
    %416 = vmatmul.mubr.bf16.gmra.mrb[0].mxu0 %v276
    %v417 = vpop.f32.mrb[0].mxu0
    %v418 = vadd.f32 %v98, %v417
    %v419 = vpop.f32.mrb[0].mxu0
    %v420 = vpop.f32.mrb[0].mxu0
    %v421 = vadd.f32 %v98, %v420
    %v422 = vpop.f32.mrb[0].mxu0
    %423 = vmatprep.mubr.bf16.mxu0 0
    %424 = vmatmul.mubr.bf16.gmra.mrb[0].mxu0 %v279
    %v425 = vpop.f32.mrb[0].mxu0
    %v426 = vadd.f32 %v98, %v425
    %v427 = vpop.f32.mrb[0].mxu0
    %v428 = vpop.f32.mrb[0].mxu0
    %v429 = vadd.f32 %v98, %v428
    %v430 = vpop.f32.mrb[0].mxu0
    %431 = vmatprep.mubr.bf16.mxu0 0
    %432 = vmatmul.mubr.bf16.gmra.mrb[0].mxu0 %v282
    %v433 = vpop.f32.mrb[0].mxu0
    %v434 = vadd.f32 %v98, %v433
    %v435 = vpop.f32.mrb[0].mxu0
    %v436 = vpop.f32.mrb[0].mxu0
    %v437 = vadd.f32 %v98, %v436
    %v438 = vpop.f32.mrb[0].mxu0
    %439 = vmatprep.mubr.bf16.mxu0 0
    %440 = vmatmul.mubr.bf16.gmra.mrb[0].mxu0 %v285
    %v441 = vpop.f32.mrb[0].mxu0
    %v442 = vadd.f32 %v98, %v441
    %v443 = vpop.f32.mrb[0].mxu0
    %v444 = vpop.f32.mrb[0].mxu0
    %v445 = vadd.f32 %v98, %v444
    %v446 = vpop.f32.mrb[0].mxu0
    %447 = vmatprep.mubr.bf16.mxu0 0
    %448 = vmatmul.mubr.bf16.gmra.mrb[0].mxu0 %v288
    %v449 = vpop.f32.mrb[0].mxu0
    %v450 = vadd.f32 %v98, %v449
    %v451 = vpop.f32.mrb[0].mxu0
    %v452 = vpop.f32.mrb[0].mxu0
    %v453 = vadd.f32 %v98, %v452
    %v454 = vpop.f32.mrb[0].mxu0
    %455 = vmatprep.mubr.bf16.mxu0 0
    %456 = vmatmul.mubr.bf16.gmra.mrb[0].mxu0 %v291
    %v457 = vpop.f32.mrb[0].mxu0
    %v458 = vadd.f32 %v98, %v457
    %v459 = vpop.f32.mrb[0].mxu0
    %v460 = vpop.f32.mrb[0].mxu0
    %v461 = vadd.f32 %v98, %v460
    %v462 = vpop.f32.mrb[0].mxu0
    %463 = vmatprep.mubr.bf16.mxu0 0
    %464 = vmatmul.mubr.bf16.gmra.mrb[0].mxu0 %v294
    %v465 = vpop.f32.mrb[0].mxu0
    %v466 = vadd.f32 %v98, %v465
    %v467 = vpop.f32.mrb[0].mxu0
    %v468 = vpop.f32.mrb[0].mxu0
    %v469 = vadd.f32 %v98, %v468
    %v470 = vpop.f32.mrb[0].mxu0
    %471 = vmatprep.mubr.bf16.mxu0 0
    %472 = vmatmul.mubr.bf16.gmra.mrb[0].mxu0 %v297
    %v473 = vpop.f32.mrb[0].mxu0
    %v474 = vadd.f32 %v98, %v473
    %v475 = vpop.f32.mrb[0].mxu0
    %v476 = vpop.f32.mrb[0].mxu0
    %v477 = vadd.f32 %v98, %v476
    %v478 = vpop.f32.mrb[0].mxu0
    %479 = vmatprep.mubr.bf16.mxu0 0
    %480 = vmatmul.mubr.bf16.gmra.mrb[0].mxu0 %v300
    %v481 = vpop.f32.mrb[0].mxu0
    %v482 = vadd.f32 %v98, %v481
    %v483 = vpop.f32.mrb[0].mxu0
    %v484 = vpop.f32.mrb[0].mxu0
    %v485 = vadd.f32 %v98, %v484
    %v486 = vpop.f32.mrb[0].mxu0
    %487 = vmatprep.mubr.bf16.mxu0 0
    %488 = vmatmul.mubr.bf16.gmra.mrb[0].mxu0 %v303
    %v489 = vpop.f32.mrb[0].mxu0
    %v490 = vadd.f32 %v98, %v489
    %v491 = vpop.f32.mrb[0].mxu0
    %v492 = vpop.f32.mrb[0].mxu0
    %v493 = vadd.f32 %v98, %v492
    %v494 = vpop.f32.mrb[0].mxu0
    %495 = vmatprep.mubr.bf16.mxu0 0
    %496 = vmatmul.mubr.bf16.gmra.mrb[0].mxu0 %v306
    %v497 = vpop.f32.mrb[0].mxu0
    %v498 = vadd.f32 %v98, %v497
    %v499 = vpop.f32.mrb[0].mxu0
    %v500 = vpop.f32.mrb[0].mxu0
    %v501 = vadd.f32 %v98, %v500
    %v502 = vpop.f32.mrb[0].mxu0
    %503 = vmatprep.mubr.bf16.mxu0 0
    %504 = vmatmul.mubr.bf16.gmra.mrb[0].mxu0 %v309
    %v505 = vpop.f32.mrb[0].mxu0
    %v506 = vadd.f32 %v98, %v505
    %v507 = vpop.f32.mrb[0].mxu0
    %v508 = vpop.f32.mrb[0].mxu0
    %v509 = vadd.f32 %v98, %v508
    %v510 = vpop.f32.mrb[0].mxu0
    %511 = vmatprep.mubr.bf16.mxu0 0
    %512 = vmatmul.mubr.bf16.gmra.mrb[0].mxu0 %v312
    %v513 = vpop.f32.mrb[0].mxu0
    %v514 = vadd.f32 %v98, %v513
    %v515 = vpop.f32.mrb[0].mxu0
    %v516 = vpop.f32.mrb[0].mxu0
    %v517 = vadd.f32 %v98, %v516
    %v518 = vpop.f32.mrb[0].mxu0
    %519 = vmatprep.mubr.bf16.mxu0 0
    %520 = vmatmul.mubr.bf16.gmra.mrb[0].mxu0 %v315
    %v521 = vpop.f32.mrb[0].mxu0
    %v522 = vadd.f32 %v98, %v521
    %v523 = vpop.f32.mrb[0].mxu0
    %v524 = vpop.f32.mrb[0].mxu0
    %v525 = vadd.f32 %v98, %v524
    %v526 = vpop.f32.mrb[0].mxu0
    %527 = vmatprep.mubr.bf16.mxu0 0
    %528 = vmatmul.mubr.bf16.gmra.mrb[0].mxu0 %v318
    %v529 = vpop.f32.mrb[0].mxu0
    %v530 = vadd.f32 %v98, %v529
    %v531 = vpop.f32.mrb[0].mxu0
    %v532 = vpop.f32.mrb[0].mxu0
    %v533 = vadd.f32 %v98, %v532
    %v534 = vpop.f32.mrb[0].mxu0
    %535 = vmatprep.mubr.bf16.mxu0 0
    %536 = vmatmul.mubr.bf16.gmra.mrb[0].mxu0 %v321
    %v537 = vpop.f32.mrb[0].mxu0
    %v538 = vadd.f32 %v98, %v537
    %v539 = vpop.f32.mrb[0].mxu0
    %v540 = vpop.f32.mrb[0].mxu0
    %v541 = vadd.f32 %v98, %v540
    %v542 = vpop.f32.mrb[0].mxu0
    %543 = vmatprep.mubr.bf16.mxu0 0
    %544 = vmatmul.mubr.bf16.gmra.mrb[0].mxu0 %v324
    %v545 = vpop.f32.mrb[0].mxu0
    %v546 = vadd.f32 %v98, %v545
    %v547 = vpop.f32.mrb[0].mxu0
    %v548 = vpop.f32.mrb[0].mxu0
    %v549 = vadd.f32 %v98, %v548
    %v550 = vpop.f32.mrb[0].mxu0
    %551 = vmatprep.mubr.bf16.mxu0 0
    %552 = vmatmul.mubr.bf16.gmra.mrb[0].mxu0 %v327
    %v553 = vpop.f32.mrb[0].mxu0
    %v554 = vadd.f32 %v98, %v553
    %v555 = vpop.f32.mrb[0].mxu0
    %v556 = vpop.f32.mrb[0].mxu0
    %v557 = vadd.f32 %v98, %v556
    %v558 = vpop.f32.mrb[0].mxu0
    %559 = vmatprep.mubr.bf16.mxu0 0
    %560 = vmatmul.mubr.bf16.gmra.mrb[0].mxu0 %v330
    %v561 = vpop.f32.mrb[0].mxu0
    %v562 = vadd.f32 %v98, %v561
    %v563 = vpop.f32.mrb[0].mxu0
    %v564 = vpop.f32.mrb[0].mxu0
    %v565 = vadd.f32 %v98, %v564
    %v566 = vpop.f32.mrb[0].mxu0
    %567 = vmatprep.mubr.bf16.mxu0 0
    %568 = vmatmul.mubr.bf16.gmra.mrb[0].mxu0 %v333
    %v569 = vpop.f32.mrb[0].mxu0
    %v570 = vadd.f32 %v98, %v569
    %v571 = vpop.f32.mrb[0].mxu0
    %v572 = vpop.f32.mrb[0].mxu0
    %v573 = vadd.f32 %v98, %v572
    %v574 = vpop.f32.mrb[0].mxu0
    %575 = vmatprep.mubr.bf16.mxu0 0
    %576 = vmatmul.mubr.bf16.gmra.mrb[0].mxu0 %v336
    %v577 = vpop.f32.mrb[0].mxu0
    %v578 = vadd.f32 %v98, %v577
    %v579 = vpop.f32.mrb[0].mxu0
    %v580 = vpop.f32.mrb[0].mxu0
    %v581 = vadd.f32 %v98, %v580
    %v582 = vpop.f32.mrb[0].mxu0
    %583 = vmatprep.mubr.bf16.mxu0 0
    %584 = vmatmul.mubr.bf16.gmra.mrb[0].mxu0 %v339
    %v585 = vpop.f32.mrb[0].mxu0
    %v586 = vadd.f32 %v98, %v585
    %v587 = vpop.f32.mrb[0].mxu0
    %v588 = vpop.f32.mrb[0].mxu0
    %v589 = vadd.f32 %v98, %v588
    %v590 = vpop.f32.mrb[0].mxu0
    %591 = vmatprep.mubr.bf16.mxu0 0
    %592 = vmatmul.mubr.bf16.gmra.mrb[0].mxu0 %v342
    %v593 = vpop.f32.mrb[0].mxu0
    %v594 = vadd.f32 %v98, %v593
    %v595 = vpop.f32.mrb[0].mxu0
    %v596 = vpop.f32.mrb[0].mxu0
    %v597 = vadd.f32 %v98, %v596
    %v598 = vpop.f32.mrb[0].mxu0
    %599 = vmatprep.mubr.bf16.mxu0 0
    %600 = vmatmul.mubr.bf16.gmra.mrb[0].mxu0 %v345
    %v601 = vpop.f32.mrb[0].mxu0
    %v602 = vadd.f32 %v98, %v601
    %v603 = vpop.f32.mrb[0].mxu0
    %v604 = vpop.f32.mrb[0].mxu0
    %v605 = vadd.f32 %v98, %v604
    %v606 = vpop.f32.mrb[0].mxu0
    %607 = vmatprep.mubr.bf16.mxu0 0
    %608 = vmatmul.mubr.bf16.gmra.mrb[0].mxu0 %v348
    %v609 = vpop.f32.mrb[0].mxu0
    %v610 = vadd.f32 %v98, %v609
    %v611 = vpop.f32.mrb[0].mxu0
    %v612 = vpop.f32.mrb[0].mxu0
    %v613 = vadd.f32 %v98, %v612
    %v614 = vpop.f32.mrb[0].mxu0
    %615 = vmatprep.mubr.bf16.mxu0 0
    %616 = vmatmul.mubr.bf16.gmra.mrb[0].mxu0 %v351
    %v617 = vpop.f32.mrb[0].mxu0
    %v618 = vadd.f32 %v98, %v617
    %v619 = vpop.f32.mrb[0].mxu0
    %v620 = vpop.f32.mrb[0].mxu0
    %v621 = vadd.f32 %v98, %v620
    %v622 = vpop.f32.mrb[0].mxu0
    %623 = vmatprep.mubr.bf16.mxu0 0
    %624 = vmatmul.mubr.bf16.gmra.mrb[0].mxu0 %v354
    %v625 = vpop.f32.mrb[0].mxu0
    %v626 = vadd.f32 %v98, %v625
    %v627 = vpop.f32.mrb[0].mxu0
    %v628 = vpop.f32.mrb[0].mxu0
    %v629 = vadd.f32 %v98, %v628
    %v630 = vpop.f32.mrb[0].mxu0
    %631 = vmatprep.mubr.bf16.mxu0 0
    %632 = vmatmul.mubr.bf16.gmra.mrb[0].mxu0 %v357
    %v633 = vpop.f32.mrb[0].mxu0
    %v634 = vadd.f32 %v98, %v633
    %v635 = vpop.f32.mrb[0].mxu0
    %v636 = vpop.f32.mrb[0].mxu0
    %v637 = vadd.f32 %v98, %v636
    %v638 = vpop.f32.mrb[0].mxu0
    %639 = vmatprep.mubr.bf16.mxu0 0
    %640 = vmatmul.mubr.bf16.gmra.mrb[0].mxu0 %v360
    %v641 = vpop.f32.mrb[0].mxu0
    %v642 = vadd.f32 %v98, %v641
    %v643 = vpop.f32.mrb[0].mxu0
    %v644 = vpop.f32.mrb[0].mxu0
    %v645 = vadd.f32 %v98, %v644
    %v646 = vpop.f32.mrb[0].mxu0
    %647 = vmatprep.mubr.bf16.mxu0 0
    %648 = vmatmul.mubr.bf16.gmra.mrb[0].mxu0 %v363
    %v649 = vpop.f32.mrb[0].mxu0
    %v650 = vadd.f32 %v98, %v649
    %v651 = vpop.f32.mrb[0].mxu0
    %v652 = vpop.f32.mrb[0].mxu0
    %v653 = vadd.f32 %v98, %v652
    %v654 = vpop.f32.mrb[0].mxu0
    %655 = vmatprep.mubr.bf16.mxu0 0
    %656 = vmatmul.mubr.bf16.gmra.mrb[0].mxu0 %v366
    %v657 = vpop.f32.mrb[0].mxu0
    %v658 = vadd.f32 %v98, %v657
    %v659 = vpop.f32.mrb[0].mxu0
    %v660 = vpop.f32.mrb[0].mxu0
    %v661 = vadd.f32 %v98, %v660
    %v662 = vpop.f32.mrb[0].mxu0
    %663 = vdwg.mxu0
    %v664 = vmax.f32 %v410, 0.0
    %v665 = vmax.f32 %v413, 0.0
    %v666 = vmax.f32 %v418, 0.0
    %v667 = vmax.f32 %v421, 0.0
    %v668 = vmax.f32 %v426, 0.0
    %v669 = vmax.f32 %v429, 0.0
    %v670 = vmax.f32 %v434, 0.0
    %v671 = vmax.f32 %v437, 0.0
    %v672 = vmax.f32 %v442, 0.0
    %v673 = vmax.f32 %v445, 0.0
    %v674 = vmax.f32 %v450, 0.0
    %v675 = vmax.f32 %v453, 0.0
    %v676 = vmax.f32 %v458, 0.0
    %v677 = vmax.f32 %v461, 0.0
    %v678 = vmax.f32 %v466, 0.0
    %v679 = vmax.f32 %v469, 0.0
    %v680 = vmax.f32 %v474, 0.0
    %v681 = vmax.f32 %v477, 0.0
    %v682 = vmax.f32 %v482, 0.0
    %v683 = vmax.f32 %v485, 0.0
    %v684 = vmax.f32 %v490, 0.0
    %v685 = vmax.f32 %v493, 0.0
    %v686 = vmax.f32 %v498, 0.0
    %v687 = vmax.f32 %v501, 0.0
    %v688 = vmax.f32 %v506, 0.0
    %v689 = vmax.f32 %v509, 0.0
    %v690 = vmax.f32 %v514, 0.0
    %v691 = vmax.f32 %v517, 0.0
    %v692 = vmax.f32 %v522, 0.0
    %v693 = vmax.f32 %v525, 0.0
    %v694 = vmax.f32 %v530, 0.0
    %v695 = vmax.f32 %v533, 0.0
    %v696 = vmax.f32 %v538, 0.0
    %v697 = vmax.f32 %v541, 0.0
    %v698 = vmax.f32 %v546, 0.0
    %v699 = vmax.f32 %v549, 0.0
    %v700 = vmax.f32 %v554, 0.0
    %v701 = vmax.f32 %v557, 0.0
    %v702 = vmax.f32 %v562, 0.0
    %v703 = vmax.f32 %v565, 0.0
    %v704 = vmax.f32 %v570, 0.0
    %v705 = vmax.f32 %v573, 0.0
    %v706 = vmax.f32 %v578, 0.0
    %v707 = vmax.f32 %v581, 0.0
    %v708 = vmax.f32 %v586, 0.0
    %v709 = vmax.f32 %v589, 0.0
    %v710 = vmax.f32 %v594, 0.0
    %v711 = vmax.f32 %v597, 0.0
    %v712 = vmax.f32 %v602, 0.0
    %v713 = vmax.f32 %v605, 0.0
    %v714 = vmax.f32 %v610, 0.0
    %v715 = vmax.f32 %v613, 0.0
    %v716 = vmax.f32 %v618, 0.0
    %v717 = vmax.f32 %v621, 0.0
    %v718 = vmax.f32 %v626, 0.0
    %v719 = vmax.f32 %v629, 0.0
    %v720 = vmax.f32 %v634, 0.0
    %v721 = vmax.f32 %v637, 0.0
    %v722 = vmax.f32 %v642, 0.0
    %v723 = vmax.f32 %v645, 0.0
    %v724 = vmax.f32 %v650, 0.0
    %v725 = vmax.f32 %v653, 0.0
    %v726 = vmax.f32 %v658, 0.0
    %v727 = vmax.f32 %v661, 0.0
    %v728 = vld [vmem:[%s3] sm:$0xff]
    %v730 = vcombine.high %v728, %v728
    %v732 = vunpack.c.l.s4 1983009808
    %v733 = vunpack.c.0.s8 %v732
    %v734 = vlaneseq
    %v735 = vshrl.u32 %v734, 7
    %v736 = vsub.s32 %v733, %v735
    %v737 = vrot.slane %v728, %v736
    %v739 = vunpack.c.l.s4 1983009808
    %v740 = vunpack.c.0.s8 %v739
    %v741 = vlaneseq
    %v742 = vshrl.u32 %v741, 7
    %v743 = vsub.s32 %v740, %v742
    %v744 = vrot.slane %v730, %v743
    %v745 = vcombine.high %v737, %v737
    %v746 = vcombine.high %v744, %v744
    %751 = vmatprep.subr.mxu0 0.0
    %752 = vmatpush1.msra.mxu0 %v664
    %753 = vmatprep.subr.mxu0 0.0
    %754 = vmatpush1.msra.mxu0 %v665
    %755 = vmatprep.subr.mxu0 0.0
    %756 = vmatpush1.msra.mxu0 %v666
    %757 = vmatprep.subr.mxu0 0.0
    %758 = vmatpush1.msra.mxu0 %v667
    %759 = vmatprep.subr.mxu0 0.0
    %760 = vmatpush1.msra.mxu0 %v668
    %761 = vmatprep.subr.mxu0 0.0
    %762 = vmatpush1.msra.mxu0 %v669
    %763 = vmatprep.subr.mxu0 0.0
    %764 = vmatpush1.msra.mxu0 %v670
    %765 = vmatprep.subr.mxu0 0.0
    %766 = vmatpush1.msra.mxu0 %v671
    %767 = vmatprep.subr.mxu0 0.0
    %768 = vmatpush1.msra.mxu0 %v672
    %769 = vmatprep.subr.mxu0 0.0
    %770 = vmatpush1.msra.mxu0 %v673
    %771 = vmatprep.subr.mxu0 0.0
    %772 = vmatpush1.msra.mxu0 %v674
    %773 = vmatprep.subr.mxu0 0.0
    %774 = vmatpush1.msra.mxu0 %v675
    %775 = vmatprep.subr.mxu0 0.0
    %776 = vmatpush1.msra.mxu0 %v676
    %777 = vmatprep.subr.mxu0 0.0
    %778 = vmatpush1.msra.mxu0 %v677
    %779 = vmatprep.subr.mxu0 0.0
    %780 = vmatpush1.msra.mxu0 %v678
    %781 = vmatprep.subr.mxu0 0.0
    %782 = vmatpush1.msra.mxu0 %v679
    %783 = vmatprep.subr.mxu0 0.0
    %784 = vmatpush1.msra.mxu0 %v680
    %785 = vmatprep.subr.mxu0 0.0
    %786 = vmatpush1.msra.mxu0 %v681
    %787 = vmatprep.subr.mxu0 0.0
    %788 = vmatpush1.msra.mxu0 %v682
    %789 = vmatprep.subr.mxu0 0.0
    %790 = vmatpush1.msra.mxu0 %v683
    %791 = vmatprep.subr.mxu0 0.0
    %792 = vmatpush1.msra.mxu0 %v684
    %793 = vmatprep.subr.mxu0 0.0
    %794 = vmatpush1.msra.mxu0 %v685
    %795 = vmatprep.subr.mxu0 0.0
    %796 = vmatpush1.msra.mxu0 %v686
    %797 = vmatprep.subr.mxu0 0.0
    %798 = vmatpush1.msra.mxu0 %v687
    %799 = vmatprep.subr.mxu0 0.0
    %800 = vmatpush1.msra.mxu0 %v688
    %801 = vmatprep.subr.mxu0 0.0
    %802 = vmatpush1.msra.mxu0 %v689
    %803 = vmatprep.subr.mxu0 0.0
    %804 = vmatpush1.msra.mxu0 %v690
    %805 = vmatprep.subr.mxu0 0.0
    %806 = vmatpush1.msra.mxu0 %v691
    %807 = vmatprep.subr.mxu0 0.0
    %808 = vmatpush1.msra.mxu0 %v692
    %809 = vmatprep.subr.mxu0 0.0
    %810 = vmatpush1.msra.mxu0 %v693
    %811 = vmatprep.subr.mxu0 0.0
    %812 = vmatpush1.msra.mxu0 %v694
    %813 = vmatprep.subr.mxu0 0.0
    %814 = vmatpush1.msra.mxu0 %v695
    %815 = vmatprep.mubr.f32.mxu0 %v745
    %816 = vmatmul.mubr.f32.gmra.mrb[0].mxu0 %v737
    %v817 = vpop.f32.mrb[0].mxu0
    %v818 = vadd.f32 0.0, %v817
    %v819 = vpop.f32.mrb[0].mxu0
    %820 = vdwg.mxu0
    %821 = vmatprep.subr.mxu0 0.0
    %822 = vmatpush1.msra.mxu0 %v696
    %823 = vmatprep.subr.mxu0 0.0
    %824 = vmatpush1.msra.mxu0 %v697
    %825 = vmatprep.subr.mxu0 0.0
    %826 = vmatpush1.msra.mxu0 %v698
    %827 = vmatprep.subr.mxu0 0.0
    %828 = vmatpush1.msra.mxu0 %v699
    %829 = vmatprep.subr.mxu0 0.0
    %830 = vmatpush1.msra.mxu0 %v700
    %831 = vmatprep.subr.mxu0 0.0
    %832 = vmatpush1.msra.mxu0 %v701
    %833 = vmatprep.subr.mxu0 0.0
    %834 = vmatpush1.msra.mxu0 %v702
    %835 = vmatprep.subr.mxu0 0.0
    %836 = vmatpush1.msra.mxu0 %v703
    %837 = vmatprep.subr.mxu0 0.0
    %838 = vmatpush1.msra.mxu0 %v704
    %839 = vmatprep.subr.mxu0 0.0
    %840 = vmatpush1.msra.mxu0 %v705
    %841 = vmatprep.subr.mxu0 0.0
    %842 = vmatpush1.msra.mxu0 %v706
    %843 = vmatprep.subr.mxu0 0.0
    %844 = vmatpush1.msra.mxu0 %v707
    %845 = vmatprep.subr.mxu0 0.0
    %846 = vmatpush1.msra.mxu0 %v708
    %847 = vmatprep.subr.mxu0 0.0
    %848 = vmatpush1.msra.mxu0 %v709
    %849 = vmatprep.subr.mxu0 0.0
    %850 = vmatpush1.msra.mxu0 %v710
    %851 = vmatprep.subr.mxu0 0.0
    %852 = vmatpush1.msra.mxu0 %v711
    %853 = vmatprep.subr.mxu0 0.0
    %854 = vmatpush1.msra.mxu0 %v712
    %855 = vmatprep.subr.mxu0 0.0
    %856 = vmatpush1.msra.mxu0 %v713
    %857 = vmatprep.subr.mxu0 0.0
    %858 = vmatpush1.msra.mxu0 %v714
    %859 = vmatprep.subr.mxu0 0.0
    %860 = vmatpush1.msra.mxu0 %v715
    %861 = vmatprep.subr.mxu0 0.0
    %862 = vmatpush1.msra.mxu0 %v716
    %863 = vmatprep.subr.mxu0 0.0
    %864 = vmatpush1.msra.mxu0 %v717
    %865 = vmatprep.subr.mxu0 0.0
    %866 = vmatpush1.msra.mxu0 %v718
    %867 = vmatprep.subr.mxu0 0.0
    %868 = vmatpush1.msra.mxu0 %v719
    %869 = vmatprep.subr.mxu0 0.0
    %870 = vmatpush1.msra.mxu0 %v720
    %871 = vmatprep.subr.mxu0 0.0
    %872 = vmatpush1.msra.mxu0 %v721
    %873 = vmatprep.subr.mxu0 0.0
    %874 = vmatpush1.msra.mxu0 %v722
    %875 = vmatprep.subr.mxu0 0.0
    %876 = vmatpush1.msra.mxu0 %v723
    %877 = vmatprep.subr.mxu0 0.0
    %878 = vmatpush1.msra.mxu0 %v724
    %879 = vmatprep.subr.mxu0 0.0
    %880 = vmatpush1.msra.mxu0 %v725
    %881 = vmatprep.subr.mxu0 0.0
    %882 = vmatpush1.msra.mxu0 %v726
    %883 = vmatprep.subr.mxu0 0.0
    %884 = vmatpush1.msra.mxu0 %v727
    %885 = vmatprep.mubr.f32.mxu0 %v746
    %886 = vmatmul.mubr.f32.gmra.mrb[0].mxu0 %v744
    %v887 = vpop.f32.mrb[0].mxu0
    %v888 = vadd.f32 %v818, %v887
    %v889 = vpop.f32.mrb[0].mxu0
    %890 = vdwg.mxu0
    %v891 = vld [vmem:[%s4] sm:$0xff]
    %v892 = vld [vmem:[%s4 + $0x8] sm:$0xff]
    %v893 = vld [vmem:[%s4 + $0x10] sm:$0xff]
    %v894 = vld [vmem:[%s4 + $0x18] sm:$0xff]
    %v895 = vld [vmem:[%s5] sm:$0x1]
    %v897 = vlaneseq
    %v898 = vshrl.u32 %v897, 7
    %v899 = vsub.s32 0, %v898
    %v900 = vrot.slane %v895, %v899
    %vm902 = vcmask 261120
    %v904 = vsel %vm902, %v888, 0
    %906 = vmatprep.subr.mxu0 0.0
    %907 = vmatpush1.msra.mxu0 %v891
    %908 = vmatprep.subr.mxu0 0.0
    %909 = vmatpush1.msra.mxu0 %v892
    %910 = vmatprep.subr.mxu0 0.0
    %911 = vmatpush1.msra.mxu0 %v893
    %912 = vmatprep.subr.mxu0 0.0
    %913 = vmatpush1.msra.mxu0 %v894
    %914 = vmatprep.subr.mxu0 0.0
    %915 = vmatpush1.msra.mxu0 0.0
    %916 = vmatprep.subr.mxu0 0.0
    %917 = vmatpush1.msra.mxu0 0.0
    %918 = vmatprep.subr.mxu0 0.0
    %919 = vmatpush1.msra.mxu0 0.0
    %920 = vmatprep.subr.mxu0 0.0
    %921 = vmatpush1.msra.mxu0 0.0
    %922 = vmatprep.subr.mxu0 0.0
    %923 = vmatpush1.msra.mxu0 0.0
    %924 = vmatprep.subr.mxu0 0.0
    %925 = vmatpush1.msra.mxu0 0.0
    %926 = vmatprep.subr.mxu0 0.0
    %927 = vmatpush1.msra.mxu0 0.0
    %928 = vmatprep.subr.mxu0 0.0
    %929 = vmatpush1.msra.mxu0 0.0
    %930 = vmatprep.subr.mxu0 0.0
    %931 = vmatpush1.msra.mxu0 0.0
    %932 = vmatprep.subr.mxu0 0.0
    %933 = vmatpush1.msra.mxu0 0.0
    %934 = vmatprep.subr.mxu0 0.0
    %935 = vmatpush1.msra.mxu0 0.0
    %936 = vmatprep.subr.mxu0 0.0
    %937 = vmatpush1.msra.mxu0 0.0
    %938 = vmatprep.subr.mxu0 0.0
    %939 = vmatpush1.msra.mxu0 0.0
    %940 = vmatprep.subr.mxu0 0.0
    %941 = vmatpush1.msra.mxu0 0.0
    %942 = vmatprep.subr.mxu0 0.0
    %943 = vmatpush1.msra.mxu0 0.0
    %944 = vmatprep.subr.mxu0 0.0
    %945 = vmatpush1.msra.mxu0 0.0
    %946 = vmatprep.subr.mxu0 0.0
    %947 = vmatpush1.msra.mxu0 0.0
    %948 = vmatprep.subr.mxu0 0.0
    %949 = vmatpush1.msra.mxu0 0.0
    %950 = vmatprep.subr.mxu0 0.0
    %951 = vmatpush1.msra.mxu0 0.0
    %952 = vmatprep.subr.mxu0 0.0
    %953 = vmatpush1.msra.mxu0 0.0
    %954 = vmatprep.subr.mxu0 0.0
    %955 = vmatpush1.msra.mxu0 0.0
    %956 = vmatprep.subr.mxu0 0.0
    %957 = vmatpush1.msra.mxu0 0.0
    %958 = vmatprep.subr.mxu0 0.0
    %959 = vmatpush1.msra.mxu0 0.0
    %960 = vmatprep.subr.mxu0 0.0
    %961 = vmatpush1.msra.mxu0 0.0
    %962 = vmatprep.subr.mxu0 0.0
    %963 = vmatpush1.msra.mxu0 0.0
    %964 = vmatprep.subr.mxu0 0.0
    %965 = vmatpush1.msra.mxu0 0.0
    %966 = vmatprep.subr.mxu0 0.0
    %967 = vmatpush1.msra.mxu0 0.0
    %968 = vmatprep.subr.mxu0 0.0
    %969 = vmatpush1.msra.mxu0 0.0
    %970 = vmatprep.mubr.f32.mxu0 0.0
    %971 = vmatmul.mubr.f32.gmra.mrb[0].mxu0 %v904
    %v972 = vpop.f32.mrb[0].mxu0
    %v973 = vadd.f32 %v900, %v972
    %v974 = vpop.f32.mrb[0].mxu0
    %975 = vdwg.mxu0
    %976 = vst [vmem:[#allocation2] sm:$0x3] %v973
    // Predicated region
    $region26: #{transfer_model_forward.1} parent=1 // pred_check
      _
    $region27: #{transfer_model_forward.1} parent=1 // pred_check_branch
      %978 = sbr.rel (0) target = $region29
    $region28: #{transfer_model_forward.1} parent=1 // pred_region
      %s980 = ssub.s32 32, 32
      %981 = vsyncadd [#allocation3], %s980
      %s983 = sshll.u32 [#allocation2], 4
      %s984 = int_to_ptr.vmem [resolvable:$true] %s983
      %986 = dma.vmem_to_hbm [thread:$0]  %s984, 32, %s6, [#allocation3]
    $region29: #{transfer_model_forward.1} parent=1 // pred_fallthru
      _
    // Predicated region
    $region30: #{transfer_model_forward.1} parent=1 // pred_check
      _
    $region31: #{transfer_model_forward.1} parent=1 // pred_check_branch
      %988 = sbr.rel (0) target = $region33
    $region32: #{transfer_model_forward.1} parent=1 // pred_region
      %989 = dma.done [#allocation3], 32
    $region33: #{transfer_model_forward.1} parent=1 // pred_fallthru
      _
    %990 = vsyncpa [#allocation3], 1

</llo_original>
